<compile_context>
chip_gen: v7x
topology: tpu7x:2x2x1
jax: 0.10.0
libtpu: 0.0.40
codegen_flags: <defaults>
</compile_context>

<pallas_src>
import math

import jax
import jax.numpy as jnp
from jax import lax
from jax.experimental import pallas as pl
from jax.experimental.pallas import tpu as pltpu

# ---------------- small, shape-consistent config (scaled-down LXMERT_REX) ----
B        = 2      # batch
NUM_ROI  = 8      # (36 in the original)
IMG_SIZE = 32     # (2048 in the original)
HIDDEN   = 32     # (768 in the original)
NB_VOCAB = 31     # vocab; vocab+1 == 32
V1       = NB_VOCAB + 1
V1_PAD   = ((V1 + 127) // 128) * 128      # lane-dense vocab axis (128 here)
NB_ANS   = 16     # (2000 in the original)
NUM_STEP = 4      # (12 in the original)
SEQ      = 6

MXU_DTYPE = jnp.bfloat16                  # MXU operand dtype; accumulate in f32
NEG_INF   = -1e30


# ----------------------------- parameters ------------------------------------
def init_params(key):
    ks = jax.random.split(key, 64)
    it = iter(ks)

    def lin(fan_in, fan_out):
        kw, kb = next(it), next(it)
        w = jax.random.normal(kw, (fan_in, fan_out), jnp.float32) / jnp.sqrt(
            jnp.float32(fan_in))
        b = jax.random.normal(kb, (1, fan_out), jnp.float32) * 0.01
        return w, b

    def gru(in_size, hid):
        # Six separate Linears like the PyTorch GRU, stacked per gate (z|r|m) on
        # a leading axis so the kernel indexes gates on axis 0 (free view, no
        # lane-axis slicing of packed 3H tensors).
        wx, bx, wh, bh = [], [], [], []
        for _ in range(3):
            w, b = lin(in_size, hid); wx.append(w); bx.append(b)
            w2, b2 = lin(hid, hid);   wh.append(w2); bh.append(b2)
        return jnp.stack(wx), jnp.stack(bx), jnp.stack(wh), jnp.stack(bh)

    p = {}
    # surrogate encoder (stand-in for LXRTEncoder)
    p["word_embed"] = jax.random.normal(next(it), (V1, HIDDEN), jnp.float32) * 0.1
    p["cls_w"], p["cls_b"] = lin(HIDDEN, HIDDEN)
    p["vis_w"], p["vis_b"] = lin(IMG_SIZE + 4, HIDDEN)
    # real LXMERT_REX heads
    p["att_v_w"], p["att_v_b"] = lin(IMG_SIZE, HIDDEN)
    p["att_q_w"], p["att_q_b"] = lin(HIDDEN, HIDDEN)
    p["q_fc_w"], p["q_fc_b"] = lin(HIDDEN, HIDDEN)
    p["ans_w"], p["ans_b"] = lin(HIDDEN, NB_ANS)
    p["att_h_w"], p["att_h_b"] = lin(HIDDEN, HIDDEN)
    p["att_w"], p["att_b"] = lin(HIDDEN, 1)                  # (H,1), (1,1)
    p["v_fc_w"], p["v_fc_b"] = lin(IMG_SIZE, HIDDEN)
    p["lang_fc_w"], p["lang_fc_b"] = lin(HIDDEN, V1)
    p["gate_w"], p["gate_b"] = lin(HIDDEN, 1)                # (H,1), (1,1)
    (p["att_rnn_wx"], p["att_rnn_bx"],
     p["att_rnn_wh"], p["att_rnn_bh"]) = gru(3 * HIDDEN, HIDDEN)
    (p["lang_rnn_wx"], p["lang_rnn_bx"],
     p["lang_rnn_wh"], p["lang_rnn_bh"]) = gru(2 * HIDDEN, HIDDEN)
    # exp_embed with padding_idx=0 (row 0 zeroed)
    emb = jax.random.normal(next(it), (V1, HIDDEN), jnp.float32) * 0.1
    p["exp_embed"] = emb.at[0].set(0.0)
    # structure_mapping.pth replaced by a deterministic row-stochastic matrix.
    smap = jax.nn.softmax(
        jax.random.normal(next(it), (V1, NUM_ROI), jnp.float32), axis=-1)
    p["smap_t"] = smap.T                                     # (NUM_ROI, V1)
    return p


# ----------------------------- surrogate encoder -----------------------------
def surrogate_encoder(params, text_input, attention_mask, img, box):
    # TODO(synk): the pretrained LXRTEncoder (cross-modal transformer) has no
    # clean in-script Pallas equivalent; it is replaced by a deterministic
    # linear surrogate producing cls_feat (B,H) and visual_feat (B,R,H).
    emb = params["word_embed"][text_input]                   # (B,SEQ,H)
    m = attention_mask[..., None].astype(jnp.float32)
    pooled = (emb * m).sum(axis=1) / jnp.maximum(m.sum(axis=1), 1.0)
    cls_feat = jnp.tanh(pooled @ params["cls_w"] + params["cls_b"])
    vis_in = jnp.concatenate([img, box], axis=-1)            # (B,R,IMG+4)
    visual_feat = jnp.tanh(vis_in @ params["vis_w"] + params["vis_b"])
    return cls_feat, visual_feat


# ----------------------------- Pallas kernels --------------------------------
def precompute_kernel(img_ref, cls_ref,
                      attv_w_ref, attv_b_ref, attq_w_ref, attq_b_ref,
                      qfc_w_ref, qfc_b_ref, vfc_w_ref, ans_w_ref, ans_b_ref,
                      fuse_ref, q_enc_ref, img_vfc_ref, ans_out_ref):
    f32 = jnp.float32
    cdt = MXU_DTYPE
    img2d = img_ref[...].reshape(B * NUM_ROI, IMG_SIZE)      # already bf16
    cls_c = cls_ref[...].astype(cdt)

    v_att = jnp.tanh(
        jnp.dot(img2d, attv_w_ref[...], preferred_element_type=f32)
        + attv_b_ref[...]).reshape(B, NUM_ROI, HIDDEN)
    q_att = jnp.tanh(
        jnp.dot(cls_c, attq_w_ref[...], preferred_element_type=f32)
        + attq_b_ref[...])
    fuse_ref[...] = v_att * q_att[:, None, :]                # (B,R,H)

    q_enc_ref[...] = jnp.tanh(
        jnp.dot(cls_c, qfc_w_ref[...], preferred_element_type=f32)
        + qfc_b_ref[...])

    # v_fc hoist:  (att @ img) @ Wv == att @ (img @ Wv); bias+tanh per step.
    img_vfc_ref[...] = jnp.dot(
        img2d, vfc_w_ref[...],
        preferred_element_type=f32).reshape(B, NUM_ROI, HIDDEN)

    ans_out_ref[...] = (
        jnp.dot(cls_c, ans_w_ref[...], preferred_element_type=f32)
        + ans_b_ref[...])


def decode_kernel(fuse_ref, q_enc_ref, img_vfc_ref, vfeat_ref,
                  arnn_wx_ref, arnn_bx_ref, arnn_wh_ref, arnn_bh_ref,
                  lrnn_wx_ref, lrnn_bx_ref, lrnn_wh_ref, lrnn_bh_ref,
                  atth_w_ref, atth_b_ref, attw_ref, attb_ref, vfcb_ref,
                  lfc_w_ref, lfc_b_ref, gatew_ref, gateb_ref,
                  smap_t_ref, embed_ref,
                  out_ref):
    f32 = jnp.float32
    cdt = MXU_DTYPE
    H = HIDDEN

    # small, loop-invariant activations (weights are read from refs at use site)
    fuse_sum = jnp.sum(fuse_ref[...], axis=1)                # (B,H)
    fuse_mean = fuse_sum * (1.0 / NUM_ROI)
    q_enc = q_enc_ref[...]                                   # (B,H)
    vfc_b = vfcb_ref[...]                                    # (1,H)
    att_b = attb_ref[0, 0]                                   # SMEM scalar
    gate_b = gateb_ref[0, 0]                                 # SMEM scalar
    lane_iota = lax.broadcasted_iota(jnp.int32, (B, V1_PAD), 1)

    def mm(x, w_ref, idx=None):
        w = w_ref[...] if idx is None else w_ref[idx]
        return jnp.dot(x.astype(cdt), w, preferred_element_type=f32)

    def gru(x, h, wx_ref, bx_ref, wh_ref, bh_ref):
        # gate order z|r|m; candidate uses memory_h(r*h) like the module's GRU.
        z = jax.nn.sigmoid(mm(x, wx_ref, 0) + bx_ref[0]
                           + mm(h, wh_ref, 0) + bh_ref[0])
        r = jax.nn.sigmoid(mm(x, wx_ref, 1) + bx_ref[1]
                           + mm(h, wh_ref, 1) + bh_ref[1])
        mem = jnp.tanh(mm(x, wx_ref, 2) + bx_ref[2]
                       + mm(r * h, wh_ref, 2) + bh_ref[2])
        return (1.0 - z) * h + z * mem

    h2_0 = jnp.zeros((B, H), f32)
    prev0 = jnp.zeros((B, H), f32)
    # step 0 uses fuse.mean(1); later steps use fuse.sum(1) (as in the module)
    x1_0 = jnp.concatenate([fuse_mean, h2_0, prev0], axis=-1)

    def step_fn(step, carry):
        x1, h2 = carry

        # ---- attention GRU
        h1 = gru(x1, h2, arnn_wx_ref, arnn_bx_ref, arnn_wh_ref, arnn_bh_ref)

        # ---- soft ROI attention; H-reduction on the MXU via (B*R,H)@(H,1)
        att_hid = mm(h1, atth_w_ref) + atth_b_ref[...]       # (B,H)
        att_h = jnp.tanh(att_hid[:, None, :] + fuse_ref[...])  # (B,R,H) f32
        logits = jnp.dot(att_h.reshape(B * NUM_ROI, H).astype(cdt),
                         attw_ref[...],
                         preferred_element_type=f32).reshape(B, NUM_ROI, 1)
        att = jax.nn.softmax(logits + att_b, axis=1)          # (B,R,1) f32

        # ---- hoisted v_fc: tiny R-wide reduction instead of IMG-wide matvec
        v_pool = jnp.sum(att * img_vfc_ref[...], axis=1)      # (B,H)
        v_enc = jnp.tanh(v_pool + vfc_b)
        fuse_enc = v_enc * q_enc

        # ---- language GRU
        x2 = jnp.concatenate([fuse_enc, h1], axis=-1)
        h2n = gru(x2, h2, lrnn_wx_ref, lrnn_bx_ref, lrnn_wh_ref, lrnn_bh_ref)

        # ---- vocab head over the lane-padded vocab axis (pad logits = -1e30)
        pred = jax.nn.softmax(mm(h2n, lfc_w_ref) + lfc_b_ref[...], axis=-1)

        # ---- explainable structure gating (gate matvec on the MXU)
        gate = jax.nn.sigmoid(mm(h2n, gatew_ref) + gate_b)    # (B,1)
        sim_logits = jnp.einsum('bqh,brh->bqr', h2n[:, None, :].astype(cdt),
                                vfeat_ref[...],
                                preferred_element_type=f32)[:, 0, :]
        sim = jax.nn.softmax(sim_logits, axis=-1)             # (B,R)
        sim_pred = mm(sim, smap_t_ref)                        # (B,V1_PAD)
        pred = gate * pred + (1.0 - gate) * sim_pred          # pad lanes stay 0

        # fold gate into padded lane V1 -> one lane-dense (128-wide) store/step
        out_ref[step] = jnp.where(lane_iota == V1, gate, pred)

        # ---- greedy word (first index of max; pad lanes are 0 so never win)
        mx = jnp.max(pred, axis=-1, keepdims=True)
        idx = jnp.min(jnp.where(pred == mx, lane_iota, V1_PAD), axis=-1)  # (B,)
        onehot = (lane_iota == idx[:, None]).astype(cdt)                  # (B,V1_PAD)
        prev_word = jnp.dot(onehot, embed_ref[...], preferred_element_type=f32)

        x1n = jnp.concatenate([fuse_sum, h2n, prev_word], axis=-1)
        return (x1n, h2n)

    # NUM_STEP is tiny here -> unroll; at production NUM_STEP=12 use a small
    # unroll factor instead.
    lax.fori_loop(0, NUM_STEP, step_fn, (x1_0, h2_0), unroll=True)


# ----------------------------- wrapper ---------------------------------------
def _vmem_limit_bytes(inputs, out_shapes):
    n = 0
    for x in inputs:
        n += int(x.size) * jnp.dtype(x.dtype).itemsize
    for s in out_shapes:
        n += int(math.prod(s.shape)) * jnp.dtype(s.dtype).itemsize
    # 2x covers in/out DMA staging + headroom; clamp to v7x's 64 MiB physical.
    return int(min(max(2 * n + (2 << 20), 4 << 20), 64 << 20))


def lxmert_rex_forward(params, img, box, text_input, token_type, attention_mask):
    del token_type  # only consumed by the (surrogate) encoder mask path
    cls_feat, visual_feat = surrogate_encoder(params, text_input,
                                              attention_mask, img, box)
    f32 = jnp.float32
    cdt = MXU_DTYPE
    pad_v = V1_PAD - V1
    vmem_spec = pl.BlockSpec(memory_space=pltpu.MemorySpace.VMEM)

    # ---- stage 1: precompute (use-once weights never enter the decode kernel)
    pre_inputs = (
        img.astype(cdt), cls_feat,
        params["att_v_w"].astype(cdt), params["att_v_b"],
        params["att_q_w"].astype(cdt), params["att_q_b"],
        params["q_fc_w"].astype(cdt), params["q_fc_b"],
        params["v_fc_w"].astype(cdt),
        params["ans_w"].astype(cdt), params["ans_b"],
    )
    pre_out_shape = (
        jax.ShapeDtypeStruct((B, NUM_ROI, HIDDEN), f32),    # fuse
        jax.ShapeDtypeStruct((B, HIDDEN), f32),             # q_enc
        jax.ShapeDtypeStruct((B, NUM_ROI, HIDDEN), f32),    # img @ v_fc_w
        jax.ShapeDtypeStruct((B, NB_ANS), f32),             # answer logits
    )
    fuse, q_enc, img_vfc, output_ans = pl.pallas_call(
        precompute_kernel,
        out_shape=pre_out_shape,
        in_specs=[vmem_spec] * len(pre_inputs),
        out_specs=(vmem_spec,) * len(pre_out_shape),
        compiler_params=pltpu.CompilerParams(
            vmem_limit_bytes=_vmem_limit_bytes(pre_inputs, pre_out_shape)),
    )(*pre_inputs)

    # ---- stage 2: decode loop (lane-padded vocab axis; gate folded in pad lane)
    lfc_w = jnp.pad(params["lang_fc_w"], ((0, 0), (0, pad_v))).astype(cdt)
    lfc_b = jnp.pad(params["lang_fc_b"], ((0, 0), (0, pad_v)),
                    constant_values=NEG_INF)
    smap_t = jnp.pad(params["smap_t"], ((0, 0), (0, pad_v))).astype(cdt)
    embed = jnp.pad(params["exp_embed"], ((0, pad_v), (0, 0))).astype(cdt)

    dec_inputs = (
        fuse, q_enc, img_vfc, visual_feat.astype(cdt),
        params["att_rnn_wx"].astype(cdt), params["att_rnn_bx"],
        params["att_rnn_wh"].astype(cdt), params["att_rnn_bh"],
        params["lang_rnn_wx"].astype(cdt), params["lang_rnn_bx"],
        params["lang_rnn_wh"].astype(cdt), params["lang_rnn_bh"],
        params["att_h_w"].astype(cdt), params["att_h_b"],
        params["att_w"].astype(cdt), params["att_b"],
        params["v_fc_b"],
        lfc_w, lfc_b,
        params["gate_w"].astype(cdt), params["gate_b"],
        smap_t, embed,
    )
    # (1,1) scalar biases go via SMEM; everything else is a whole-array VMEM block.
    dec_in_specs = [
        pl.BlockSpec(memory_space=pltpu.MemorySpace.SMEM)
        if (x.ndim == 2 and x.shape == (1, 1)) else vmem_spec
        for x in dec_inputs
    ]
    dec_out_shape = jax.ShapeDtypeStruct((NUM_STEP, B, V1_PAD), f32)
    out = pl.pallas_call(
        decode_kernel,
        out_shape=dec_out_shape,
        in_specs=dec_in_specs,
        out_specs=vmem_spec,
        compiler_params=pltpu.CompilerParams(
            vmem_limit_bytes=_vmem_limit_bytes(dec_inputs, (dec_out_shape,))),
    )(*dec_inputs)

    out = jnp.transpose(out, (1, 0, 2))          # (B, NUM_STEP, V1_PAD), tiny XLA op
    output_sent = out[..., :V1]
    output_gate = out[..., V1]
    return output_ans, output_sent, output_gate


# ----------------------------- pure-JAX reference ----------------------------
def reference_forward(params, img, box, text_input, token_type, attention_mask):
    cls_feat, visual_feat = surrogate_encoder(params, text_input,
                                              attention_mask, img, box)
    v_att = jnp.tanh(img @ params["att_v_w"] + params["att_v_b"])
    q_att = jnp.tanh(cls_feat @ params["att_q_w"] + params["att_q_b"])
    fuse_feat = v_att * q_att[:, None, :]
    q_enc = jnp.tanh(cls_feat @ params["q_fc_w"] + params["q_fc_b"])
    output_ans = cls_feat @ params["ans_w"] + params["ans_b"]

    def gru_cell(x, h, wx, bx, wh, bh):
        z = jax.nn.sigmoid(x @ wx[0] + bx[0] + h @ wh[0] + bh[0])
        r = jax.nn.sigmoid(x @ wx[1] + bx[1] + h @ wh[1] + bh[1])
        mem = jnp.tanh(x @ wx[2] + bx[2] + (r * h) @ wh[2] + bh[2])
        return (1.0 - z) * h + z * mem

    prev_word = jnp.zeros((B, HIDDEN), jnp.float32)
    h2 = jnp.zeros((B, HIDDEN), jnp.float32)
    sents, gates = [], []
    x1 = jnp.concatenate([fuse_feat.mean(1), h2, prev_word], axis=-1)
    for _ in range(NUM_STEP):
        h1 = gru_cell(x1, h2, params["att_rnn_wx"], params["att_rnn_bx"],
                      params["att_rnn_wh"], params["att_rnn_bh"])
        att_h = jnp.tanh((h1 @ params["att_h_w"] + params["att_h_b"])[:, None, :]
                         + fuse_feat)
        logits = att_h @ params["att_w"] + params["att_b"][0, 0]      # (B,R,1)
        att = jax.nn.softmax(logits, axis=1)
        att_x = jnp.sum(att * img, axis=1)                            # (B,IMG)
        v_enc = jnp.tanh(att_x @ params["v_fc_w"] + params["v_fc_b"])
        fuse_enc = v_enc * q_enc
        x2 = jnp.concatenate([fuse_enc, h1], axis=-1)
        h2 = gru_cell(x2, h2, params["lang_rnn_wx"], params["lang_rnn_bx"],
                      params["lang_rnn_wh"], params["lang_rnn_bh"])
        pred_word = jax.nn.softmax(h2 @ params["lang_fc_w"] + params["lang_fc_b"],
                                   axis=-1)
        gate = jax.nn.sigmoid(h2 @ params["gate_w"] + params["gate_b"][0, 0])
        sim = jax.nn.softmax(jnp.einsum('bh,brh->br', h2, visual_feat), axis=-1)
        sim_pred = sim @ params["smap_t"]
        pred_word = gate * pred_word + (1.0 - gate) * sim_pred
        sents.append(pred_word)
        gates.append(gate)
        idx = jnp.argmax(pred_word, axis=-1)
        prev_word = params["exp_embed"][idx]
        x1 = jnp.concatenate([fuse_feat.sum(1), h2, prev_word], axis=-1)
    return output_ans, jnp.stack(sents, axis=1), jnp.concatenate(gates, axis=1)


# ----------------------------- main -------------------------------------------
if __name__ == "__main__":
    root = jax.random.PRNGKey(0)
    pkey, dkey = jax.random.split(root)
    params = init_params(pkey)

    k1, k2, k3 = jax.random.split(dkey, 3)
    img = jax.random.normal(k1, (B, NUM_ROI, IMG_SIZE), jnp.float32)
    box = jax.random.uniform(k2, (B, NUM_ROI, 4), jnp.float32)
    text_input = jax.random.randint(k3, (B, SEQ), 0, V1).astype(jnp.int32)
    token_type = jnp.zeros((B, SEQ), jnp.int32)
    attention_mask = jnp.ones((B, SEQ), jnp.float32)

    out_ans, out_sent, out_gate = lxmert_rex_forward(
        params, img, box, text_input, token_type, attention_mask)
    jax.block_until_ready((out_ans, out_sent, out_gate))

    ref_ans, ref_sent, ref_gate = reference_forward(
        params, img, box, text_input, token_type, attention_mask)

    assert out_ans.shape == (B, NB_ANS)
    assert out_sent.shape == (B, NUM_STEP, V1)
    assert out_gate.shape == (B, NUM_STEP)
    assert bool(jnp.all(jnp.isfinite(out_sent)))
    assert bool(jnp.all(jnp.isfinite(out_gate)))
    # output_ans and the step-0 predictions contain no argmax feedback, so they
    # must match the pure-f32 reference up to bf16-operand / reassociation error
    # (later steps may diverge only through argmax tie-breaking).
    assert bool(jnp.allclose(out_ans, ref_ans, atol=3e-2, rtol=3e-2))
    assert bool(jnp.allclose(out_sent[:, 0], ref_sent[:, 0], atol=3e-2, rtol=3e-2))
    assert bool(jnp.allclose(out_gate[:, 0], ref_gate[:, 0], atol=6e-2, rtol=6e-2))

    print("KERNEL_OK")
</pallas_src>

<mosaic_0001>
module attributes {stable_mosaic.version = 11 : i64} {
  func.func @precompute_kernel(%arg0: memref<2x8x32xbf16, #tpu.memory_space<vmem>>, %arg1: memref<2x32xf32, #tpu.memory_space<vmem>>, %arg2: memref<32x32xbf16, #tpu.memory_space<vmem>>, %arg3: memref<1x32xf32, #tpu.memory_space<vmem>>, %arg4: memref<32x32xbf16, #tpu.memory_space<vmem>>, %arg5: memref<1x32xf32, #tpu.memory_space<vmem>>, %arg6: memref<32x32xbf16, #tpu.memory_space<vmem>>, %arg7: memref<1x32xf32, #tpu.memory_space<vmem>>, %arg8: memref<32x32xbf16, #tpu.memory_space<vmem>>, %arg9: memref<32x16xbf16, #tpu.memory_space<vmem>>, %arg10: memref<1x16xf32, #tpu.memory_space<vmem>>, %arg11: memref<2x8x32xf32, #tpu.memory_space<vmem>>, %arg12: memref<2x32xf32, #tpu.memory_space<vmem>>, %arg13: memref<2x8x32xf32, #tpu.memory_space<vmem>>, %arg14: memref<2x16xf32, #tpu.memory_space<vmem>>) attributes {dimension_semantics = [], scalar_prefetch = 0 : i64, scratch_operands = 0 : i64, tpu.core_type = #tpu.core_type<tc>} {
    %c0 = arith.constant 0 : index
    %c0_0 = arith.constant 0 : index
    %c0_1 = arith.constant 0 : index
    %0 = vector.load %arg0[%c0, %c0_0, %c0_1] : memref<2x8x32xbf16, #tpu.memory_space<vmem>>, vector<2x8x32xbf16>
    %1 = vector.shape_cast %0 : vector<2x8x32xbf16> to vector<16x32xbf16>
    %c0_2 = arith.constant 0 : index
    %c0_3 = arith.constant 0 : index
    %2 = vector.load %arg1[%c0_2, %c0_3] : memref<2x32xf32, #tpu.memory_space<vmem>>, vector<2x32xf32>
    %3 = arith.truncf %2 : vector<2x32xf32> to vector<2x32xbf16>
    %c0_4 = arith.constant 0 : index
    %c0_5 = arith.constant 0 : index
    %4 = vector.load %arg2[%c0_4, %c0_5] : memref<32x32xbf16, #tpu.memory_space<vmem>>, vector<32x32xbf16>
    %cst = arith.constant dense<0.000000e+00> : vector<16x32xf32>
    %5 = tpu.matmul %1, %4, %cst {dimension_numbers = #tpu.dot_dimension_numbers<[1], [0], [0], [1], [0, 0, 1, 1], [], []>} : vector<16x32xbf16>, vector<32x32xbf16>, vector<16x32xf32> -> vector<16x32xf32>
    %c0_6 = arith.constant 0 : index
    %c0_7 = arith.constant 0 : index
    %6 = vector.load %arg3[%c0_6, %c0_7] : memref<1x32xf32, #tpu.memory_space<vmem>>, vector<1x32xf32>
    %7 = vector.broadcast %6 : vector<1x32xf32> to vector<16x32xf32>
    %8 = arith.addf %5, %7 : vector<16x32xf32>
    %9 = math.tanh %8 : vector<16x32xf32>
    %10 = vector.shape_cast %9 : vector<16x32xf32> to vector<2x8x32xf32>
    %c0_8 = arith.constant 0 : index
    %c0_9 = arith.constant 0 : index
    %11 = vector.load %arg4[%c0_8, %c0_9] : memref<32x32xbf16, #tpu.memory_space<vmem>>, vector<32x32xbf16>
    %cst_10 = arith.constant dense<0.000000e+00> : vector<2x32xf32>
    %12 = tpu.matmul %3, %11, %cst_10 {dimension_numbers = #tpu.dot_dimension_numbers<[1], [0], [0], [1], [0, 0, 1, 1], [], []>} : vector<2x32xbf16>, vector<32x32xbf16>, vector<2x32xf32> -> vector<2x32xf32>
    %c0_11 = arith.constant 0 : index
    %c0_12 = arith.constant 0 : index
    %13 = vector.load %arg5[%c0_11, %c0_12] : memref<1x32xf32, #tpu.memory_space<vmem>>, vector<1x32xf32>
    %14 = vector.broadcast %13 : vector<1x32xf32> to vector<2x32xf32>
    %15 = arith.addf %12, %14 : vector<2x32xf32>
    %16 = math.tanh %15 : vector<2x32xf32>
    %17 = vector.shape_cast %16 : vector<2x32xf32> to vector<2x1x32xf32>
    %18 = vector.broadcast %17 : vector<2x1x32xf32> to vector<2x8x32xf32>
    %19 = arith.mulf %10, %18 : vector<2x8x32xf32>
    %c0_13 = arith.constant 0 : index
    %c0_14 = arith.constant 0 : index
    %c0_15 = arith.constant 0 : index
    %20 = vector.load %arg11[%c0_13, %c0_14, %c0_15] : memref<2x8x32xf32, #tpu.memory_space<vmem>>, vector<2x8x32xf32>
    tpu.vector_store %arg11[%c0_13, %c0_14, %c0_15], %19 {strides = array<i32>} : memref<2x8x32xf32, #tpu.memory_space<vmem>>, vector<2x8x32xf32>,
    %c0_16 = arith.constant 0 : index
    %c0_17 = arith.constant 0 : index
    %21 = vector.load %arg6[%c0_16, %c0_17] : memref<32x32xbf16, #tpu.memory_space<vmem>>, vector<32x32xbf16>
    %cst_18 = arith.constant dense<0.000000e+00> : vector<2x32xf32>
    %22 = tpu.matmul %3, %21, %cst_18 {dimension_numbers = #tpu.dot_dimension_numbers<[1], [0], [0], [1], [0, 0, 1, 1], [], []>} : vector<2x32xbf16>, vector<32x32xbf16>, vector<2x32xf32> -> vector<2x32xf32>
    %c0_19 = arith.constant 0 : index
    %c0_20 = arith.constant 0 : index
    %23 = vector.load %arg7[%c0_19, %c0_20] : memref<1x32xf32, #tpu.memory_space<vmem>>, vector<1x32xf32>
    %24 = vector.broadcast %23 : vector<1x32xf32> to vector<2x32xf32>
    %25 = arith.addf %22, %24 : vector<2x32xf32>
    %26 = math.tanh %25 : vector<2x32xf32>
    %c0_21 = arith.constant 0 : index
    %c0_22 = arith.constant 0 : index
    %27 = vector.load %arg12[%c0_21, %c0_22] : memref<2x32xf32, #tpu.memory_space<vmem>>, vector<2x32xf32>
    tpu.vector_store %arg12[%c0_21, %c0_22], %26 {strides = array<i32>} : memref<2x32xf32, #tpu.memory_space<vmem>>, vector<2x32xf32>,
    %c0_23 = arith.constant 0 : index
    %c0_24 = arith.constant 0 : index
    %28 = vector.load %arg8[%c0_23, %c0_24] : memref<32x32xbf16, #tpu.memory_space<vmem>>, vector<32x32xbf16>
    %cst_25 = arith.constant dense<0.000000e+00> : vector<16x32xf32>
    %29 = tpu.matmul %1, %28, %cst_25 {dimension_numbers = #tpu.dot_dimension_numbers<[1], [0], [0], [1], [0, 0, 1, 1], [], []>} : vector<16x32xbf16>, vector<32x32xbf16>, vector<16x32xf32> -> vector<16x32xf32>
    %30 = vector.shape_cast %29 : vector<16x32xf32> to vector<2x8x32xf32>
    %c0_26 = arith.constant 0 : index
    %c0_27 = arith.constant 0 : index
    %c0_28 = arith.constant 0 : index
    %31 = vector.load %arg13[%c0_26, %c0_27, %c0_28] : memref<2x8x32xf32, #tpu.memory_space<vmem>>, vector<2x8x32xf32>
    tpu.vector_store %arg13[%c0_26, %c0_27, %c0_28], %30 {strides = array<i32>} : memref<2x8x32xf32, #tpu.memory_space<vmem>>, vector<2x8x32xf32>,
    %c0_29 = arith.constant 0 : index
    %c0_30 = arith.constant 0 : index
    %32 = vector.load %arg9[%c0_29, %c0_30] : memref<32x16xbf16, #tpu.memory_space<vmem>>, vector<32x16xbf16>
    %cst_31 = arith.constant dense<0.000000e+00> : vector<2x16xf32>
    %33 = tpu.matmul %3, %32, %cst_31 {dimension_numbers = #tpu.dot_dimension_numbers<[1], [0], [0], [1], [0, 0, 1, 1], [], []>} : vector<2x32xbf16>, vector<32x16xbf16>, vector<2x16xf32> -> vector<2x16xf32>
    %c0_32 = arith.constant 0 : index
    %c0_33 = arith.constant 0 : index
    %34 = vector.load %arg10[%c0_32, %c0_33] : memref<1x16xf32, #tpu.memory_space<vmem>>, vector<1x16xf32>
    %35 = vector.broadcast %34 : vector<1x16xf32> to vector<2x16xf32>
    %36 = arith.addf %33, %35 : vector<2x16xf32>
    %c0_34 = arith.constant 0 : index
    %c0_35 = arith.constant 0 : index
    %37 = vector.load %arg14[%c0_34, %c0_35] : memref<2x16xf32, #tpu.memory_space<vmem>>, vector<2x16xf32>
    tpu.vector_store %arg14[%c0_34, %c0_35], %36 {strides = array<i32>} : memref<2x16xf32, #tpu.memory_space<vmem>>, vector<2x16xf32>,
    return
  }
}

</mosaic_0001>

<llo_original>
// kernel: tpu_custom_call.1
$region0: #{tpu_custom_call.1}
  #allocation0 [shape = 'u32[]', space=smem, size = 0x4, offset = 0x4, fixed_abs, tag = 'smem constant byte address 0x4 - core index']
  #allocation1 [shape = 'u32[144,128]{1,0:T(1,128)}', space=vmem, size = 0x12000, scoped, tag = 'internal scratch']
  %s0 = inlined_call_operand.hbm [shape: bf16[2,8,32], index: 0, kind: input, shape index: {}]
  %s1 = inlined_call_operand.vmem [shape: f32[2,32], index: 1, kind: input, shape index: {}]
  %s2 = inlined_call_operand.vmem [shape: bf16[32,32], index: 2, kind: input, shape index: {}]
  %s3 = inlined_call_operand.hbm [shape: f32[1,32], index: 3, kind: input, shape index: {}]
  %s4 = inlined_call_operand.vmem [shape: bf16[32,32], index: 4, kind: input, shape index: {}]
  %s5 = inlined_call_operand.hbm [shape: f32[1,32], index: 5, kind: input, shape index: {}]
  %s6 = inlined_call_operand.hbm [shape: bf16[32,32], index: 6, kind: input, shape index: {}]
  %s7 = inlined_call_operand.hbm [shape: f32[1,32], index: 7, kind: input, shape index: {}]
  %s8 = inlined_call_operand.vmem [shape: bf16[32,32], index: 8, kind: input, shape index: {}]
  %s9 = inlined_call_operand.vmem [shape: bf16[32,16], index: 9, kind: input, shape index: {}]
  %s10 = inlined_call_operand.vmem [shape: f32[1,16], index: 10, kind: input, shape index: {}]
  %s11 = inlined_call_operand.hbm [shape: f32[2,8,32], index: 11, kind: output, shape index: {0}]
  %s12 = inlined_call_operand.hbm [shape: f32[2,32], index: 12, kind: output, shape index: {1}]
  %s13 = inlined_call_operand.hbm [shape: f32[2,8,32], index: 13, kind: output, shape index: {2}]
  %s14 = inlined_call_operand.hbm [shape: f32[2,16], index: 14, kind: output, shape index: {3}]
  %15 = xla_tuple %s11, %s12, %s13, %s14
  %s16 = sld [smem:[#allocation0]]
  $region98: #{tpu_custom_call.1} parent=0
    _
  %s18 = ssub.s32 1, %s16
  %s19 = scalar_select 0, %s18, %s16
  $region1: #{tpu_custom_call.1} parent=0
    #allocation2 [shape = 'u8[4096]{0}', space=vmem, size = 0x1000, scoped, tag = 'input window, operand 0, single buffered']
    #allocation3 [shape = 's32[1]{0}', space=sflag, size = 0x4, scoped, tag = 'scoped memory for tpu_custom_call.1']
    #allocation4 [shape = 's32[1]{0}', space=sflag, size = 0x4, scoped, tag = 'scoped memory for tpu_custom_call.1']
    #allocation5 [shape = 'u8[512]{0}', space=vmem, size = 0x400, scoped, tag = 'input window, operand 3, single buffered']
    #allocation6 [shape = 's32[1]{0}', space=sflag, size = 0x4, scoped, tag = 'scoped memory for tpu_custom_call.1']
    #allocation7 [shape = 'u8[512]{0}', space=vmem, size = 0x400, scoped, tag = 'input window, operand 5, single buffered']
    #allocation8 [shape = 'u8[8192]{0}', space=vmem, size = 0x2000, scoped, tag = 'input window, operand 6, single buffered']
    #allocation9 [shape = 's32[1]{0}', space=sflag, size = 0x4, scoped, tag = 'scoped memory for tpu_custom_call.1']
    #allocation10 [shape = 'u8[512]{0}', space=vmem, size = 0x400, scoped, tag = 'input window, operand 7, single buffered']
    #allocation11 [shape = 'u8[8192]{0}', space=vmem, size = 0x2000, scoped, tag = 'output window, operand 0, single buffered']
    #allocation12 [shape = 'u8[1024]{0}', space=vmem, size = 0x400, scoped, tag = 'output window, operand 1, single buffered']
    #allocation13 [shape = 's32[1]{0}', space=sflag, size = 0x4, scoped, tag = 'scoped memory for tpu_custom_call.1']
    #allocation14 [shape = 'u8[8192]{0}', space=vmem, size = 0x2000, scoped, tag = 'output window, operand 2, single buffered']
    #allocation15 [shape = 'u8[1024]{0}', space=vmem, size = 0x400, scoped, tag = 'output window, operand 3, single buffered']
    #allocation16 [shape = 's32[1]{0}', space=sflag, size = 0x4, scoped, tag = 'scoped memory for tpu_custom_call.1']
    %20 = vsyncpa [#allocation3], 0
    %21 = vsyncpa [#allocation6], 0
    %22 = vsyncpa [#allocation9], 0
    %23 = vsyncpa [#allocation4], 0
    %24 = vsyncpa [#allocation13], 0
    %25 = vsyncpa [#allocation16], 0
    // Predicated region
    $region2: #{tpu_custom_call.1} parent=1 // pred_check
      _
    $region3: #{tpu_custom_call.1} parent=1 // pred_check_branch
      %27 = sbr.rel (0) target = $region5
    $region4: #{tpu_custom_call.1} parent=1 // pred_region
      %s29 = ssub.s32 128, 128
      %30 = vsyncadd [#allocation3], %s29
      %s31 = sshll.u32 [#allocation2], 4
      %s32 = int_to_ptr.vmem [resolvable:$true] %s31
      %37 = dma.hbm_to_vmem [thread:$0]  %s0, 128, %s32, [#allocation3], 64, 64, 4
    $region5: #{tpu_custom_call.1} parent=1 // pred_fallthru
      _
    // Predicated region
    $region6: #{tpu_custom_call.1} parent=1 // pred_check
      _
    $region7: #{tpu_custom_call.1} parent=1 // pred_check_branch
      %39 = sbr.rel (0) target = $region9
    $region8: #{tpu_custom_call.1} parent=1 // pred_region
      _
    $region9: #{tpu_custom_call.1} parent=1 // pred_fallthru
      _
    // Predicated region
    $region10: #{tpu_custom_call.1} parent=1 // pred_check
      _
    $region11: #{tpu_custom_call.1} parent=1 // pred_check_branch
      %41 = sbr.rel (0) target = $region13
    $region12: #{tpu_custom_call.1} parent=1 // pred_region
      _
    $region13: #{tpu_custom_call.1} parent=1 // pred_fallthru
      _
    // Predicated region
    $region14: #{tpu_custom_call.1} parent=1 // pred_check
      _
    $region15: #{tpu_custom_call.1} parent=1 // pred_check_branch
      %43 = sbr.rel (0) target = $region17
    $region16: #{tpu_custom_call.1} parent=1 // pred_region
      %s45 = ssub.s32 16, 16
      %46 = vsyncadd [#allocation6], %s45
      %s48 = sshll.u32 [#allocation5], 4
      %s49 = int_to_ptr.vmem [resolvable:$true] %s48
      %51 = dma.hbm_to_vmem [thread:$0]  %s3, 16, %s49, [#allocation6]
    $region17: #{tpu_custom_call.1} parent=1 // pred_fallthru
      _
    // Predicated region
    $region18: #{tpu_custom_call.1} parent=1 // pred_check
      _
    $region19: #{tpu_custom_call.1} parent=1 // pred_check_branch
      %53 = sbr.rel (0) target = $region21
    $region20: #{tpu_custom_call.1} parent=1 // pred_region
      _
    $region21: #{tpu_custom_call.1} parent=1 // pred_fallthru
      _
    // Predicated region
    $region22: #{tpu_custom_call.1} parent=1 // pred_check
      _
    $region23: #{tpu_custom_call.1} parent=1 // pred_check_branch
      %55 = sbr.rel (0) target = $region25
    $region24: #{tpu_custom_call.1} parent=1 // pred_region
      %s57 = ssub.s32 16, 16
      %58 = vsyncadd [#allocation6], %s57
      %s60 = sshll.u32 [#allocation7], 4
      %s61 = int_to_ptr.vmem [resolvable:$true] %s60
      %63 = dma.hbm_to_vmem [thread:$0]  %s5, 16, %s61, [#allocation6]
    $region25: #{tpu_custom_call.1} parent=1 // pred_fallthru
      _
    // Predicated region
    $region26: #{tpu_custom_call.1} parent=1 // pred_check
      _
    $region27: #{tpu_custom_call.1} parent=1 // pred_check_branch
      %65 = sbr.rel (0) target = $region29
    $region28: #{tpu_custom_call.1} parent=1 // pred_region
      %s67 = ssub.s32 256, 256
      %68 = vsyncadd [#allocation9], %s67
      %s69 = sshll.u32 [#allocation8], 4
      %s70 = int_to_ptr.vmem [resolvable:$true] %s69
      %75 = dma.hbm_to_vmem [thread:$0]  %s6, 256, %s70, [#allocation9], 64, 64, 4
    $region29: #{tpu_custom_call.1} parent=1 // pred_fallthru
      _
    // Predicated region
    $region30: #{tpu_custom_call.1} parent=1 // pred_check
      _
    $region31: #{tpu_custom_call.1} parent=1 // pred_check_branch
      %77 = sbr.rel (0) target = $region33
    $region32: #{tpu_custom_call.1} parent=1 // pred_region
      %s79 = ssub.s32 16, 16
      %80 = vsyncadd [#allocation9], %s79
      %s82 = sshll.u32 [#allocation10], 4
      %s83 = int_to_ptr.vmem [resolvable:$true] %s82
      %85 = dma.hbm_to_vmem [thread:$0]  %s7, 16, %s83, [#allocation9]
    $region33: #{tpu_custom_call.1} parent=1 // pred_fallthru
      _
    // Predicated region
    $region34: #{tpu_custom_call.1} parent=1 // pred_check
      _
    $region35: #{tpu_custom_call.1} parent=1 // pred_check_branch
      %87 = sbr.rel (0) target = $region37
    $region36: #{tpu_custom_call.1} parent=1 // pred_region
      _
    $region37: #{tpu_custom_call.1} parent=1 // pred_fallthru
      _
    // Predicated region
    $region38: #{tpu_custom_call.1} parent=1 // pred_check
      _
    $region39: #{tpu_custom_call.1} parent=1 // pred_check_branch
      %89 = sbr.rel (0) target = $region41
    $region40: #{tpu_custom_call.1} parent=1 // pred_region
      _
    $region41: #{tpu_custom_call.1} parent=1 // pred_fallthru
      _
    // Predicated region
    $region42: #{tpu_custom_call.1} parent=1 // pred_check
      _
    $region43: #{tpu_custom_call.1} parent=1 // pred_check_branch
      %91 = sbr.rel (0) target = $region45
    $region44: #{tpu_custom_call.1} parent=1 // pred_region
      _
    $region45: #{tpu_custom_call.1} parent=1 // pred_fallthru
      _
    // Predicated region
    $region46: #{tpu_custom_call.1} parent=1 // pred_check
      _
    $region47: #{tpu_custom_call.1} parent=1 // pred_check_branch
      %93 = sbr.rel (0) target = $region49
    $region48: #{tpu_custom_call.1} parent=1 // pred_region
      %94 = dma.done [#allocation3], 128
    $region49: #{tpu_custom_call.1} parent=1 // pred_fallthru
      _
    // Predicated region
    $region50: #{tpu_custom_call.1} parent=1 // pred_check
      _
    $region51: #{tpu_custom_call.1} parent=1 // pred_check_branch
      %96 = sbr.rel (0) target = $region53
    $region52: #{tpu_custom_call.1} parent=1 // pred_region
      %97 = dma.done [#allocation6], 16
    $region53: #{tpu_custom_call.1} parent=1 // pred_fallthru
      _
    // Predicated region
    $region54: #{tpu_custom_call.1} parent=1 // pred_check
      _
    $region55: #{tpu_custom_call.1} parent=1 // pred_check_branch
      %99 = sbr.rel (0) target = $region57
    $region56: #{tpu_custom_call.1} parent=1 // pred_region
      %100 = dma.done [#allocation6], 16
    $region57: #{tpu_custom_call.1} parent=1 // pred_fallthru
      _
    // Predicated region
    $region58: #{tpu_custom_call.1} parent=1 // pred_check
      _
    $region59: #{tpu_custom_call.1} parent=1 // pred_check_branch
      %102 = sbr.rel (0) target = $region61
    $region60: #{tpu_custom_call.1} parent=1 // pred_region
      %103 = dma.done [#allocation9], 256
    $region61: #{tpu_custom_call.1} parent=1 // pred_fallthru
      _
    // Predicated region
    $region62: #{tpu_custom_call.1} parent=1 // pred_check
      _
    $region63: #{tpu_custom_call.1} parent=1 // pred_check_branch
      %105 = sbr.rel (0) target = $region65
    $region64: #{tpu_custom_call.1} parent=1 // pred_region
      %106 = dma.done [#allocation9], 16
    $region65: #{tpu_custom_call.1} parent=1 // pred_fallthru
      _
    %v108 = vld [vmem:[#allocation2] sm:$0xf]
    %v109 = vld [vmem:[#allocation2 + $0x4] sm:$0xf]
    %v110 = vld [vmem:[%s1] sm:$0x3]
    %v111 = vpack.c.bf16 %v110, %v110
    %v112 = vld [vmem:[%s2] sm:$0xf]
    %v113 = vld [vmem:[%s2 + $0x4] sm:$0xf]
    %v114 = vld [vmem:[%s2 + $0x8] sm:$0xf]
    %v115 = vld [vmem:[%s2 + $0xc] sm:$0xf]
    %v116 = vld [vmem:[#allocation5] sm:$0x1]
    %v118 = vlaneseq
    %v119 = vshrl.u32 %v118, 7
    %v120 = vsub.s32 0, %v119
    %v121 = vrot.slane %v116, %v120
    %v125 = vunpack.c.l.b16 %v108
    %v126 = vunpack.c.l.b16 %v109
    %v127 = vpack.c.b16 %v126, %v125
    %v132 = vunpack.c.l.b16 %v112
    %v133 = vunpack.c.l.b16 %v113
    %v134 = vunpack.c.l.b16 %v114
    %v135 = vunpack.c.l.b16 %v115
    %v136 = vpack.c.b16 %v133, %v132
    %v137 = vpack.c.b16 %v135, %v134
    %vm140 = vcmask 261120
    %v142 = vsel %vm140, %v127, 0
    %144 = vmatprep.subr.bf16.mxu0 0
    %145 = vmatpush1.bf16.msra.mxu0 %v136
    %146 = vmatprep.subr.bf16.mxu0 0
    %147 = vmatpush1.bf16.msra.mxu0 %v137
    %148 = vmatprep.subr.bf16.mxu0 0
    %149 = vmatpush1.bf16.msra.mxu0 0
    %150 = vmatprep.subr.bf16.mxu0 0
    %151 = vmatpush1.bf16.msra.mxu0 0
    %152 = vmatprep.subr.bf16.mxu0 0
    %153 = vmatpush1.bf16.msra.mxu0 0
    %154 = vmatprep.subr.bf16.mxu0 0
    %155 = vmatpush1.bf16.msra.mxu0 0
    %156 = vmatprep.subr.bf16.mxu0 0
    %157 = vmatpush1.bf16.msra.mxu0 0
    %158 = vmatprep.subr.bf16.mxu0 0
    %159 = vmatpush1.bf16.msra.mxu0 0
    %160 = vmatprep.subr.bf16.mxu0 0
    %161 = vmatpush1.bf16.msra.mxu0 0
    %162 = vmatprep.subr.bf16.mxu0 0
    %163 = vmatpush1.bf16.msra.mxu0 0
    %164 = vmatprep.subr.bf16.mxu0 0
    %165 = vmatpush1.bf16.msra.mxu0 0
    %166 = vmatprep.subr.bf16.mxu0 0
    %167 = vmatpush1.bf16.msra.mxu0 0
    %168 = vmatprep.subr.bf16.mxu0 0
    %169 = vmatpush1.bf16.msra.mxu0 0
    %170 = vmatprep.subr.bf16.mxu0 0
    %171 = vmatpush1.bf16.msra.mxu0 0
    %172 = vmatprep.subr.bf16.mxu0 0
    %173 = vmatpush1.bf16.msra.mxu0 0
    %174 = vmatprep.subr.bf16.mxu0 0
    %175 = vmatpush1.bf16.msra.mxu0 0
    %176 = vmatprep.mubr.bf16.mxu0 0
    %177 = vmatmul.mubr.bf16.gmra.mrb[0].mxu0 %v142
    %v178 = vpop.f32.mrb[0].mxu0
    %v179 = vadd.f32 %v121, %v178
    %v180 = vpop.f32.mrb[0].mxu0
    %v181 = vpop.f32.mrb[0].mxu0
    %v182 = vadd.f32 %v121, %v181
    %v183 = vpop.f32.mrb[0].mxu0
    %184 = vdwg.mxu0
    %v185 = vtanh.pop %v179
    %v186 = vtanh.pop %v182
    %v187 = vld [vmem:[%s4] sm:$0xf]
    %v188 = vld [vmem:[%s4 + $0x4] sm:$0xf]
    %v189 = vld [vmem:[%s4 + $0x8] sm:$0xf]
    %v190 = vld [vmem:[%s4 + $0xc] sm:$0xf]
    %v191 = vld [vmem:[#allocation7] sm:$0x1]
    %v193 = vlaneseq
    %v194 = vshrl.u32 %v193, 7
    %v195 = vsub.s32 0, %v194
    %v196 = vrot.slane %v191, %v195
    %v202 = vunpack.c.l.b16 %v187
    %v203 = vunpack.c.l.b16 %v188
    %v204 = vunpack.c.l.b16 %v189
    %v205 = vunpack.c.l.b16 %v190
    %v206 = vpack.c.b16 %v203, %v202
    %v207 = vpack.c.b16 %v205, %v204
    %v211 = vsel %vm140, %v111, 0
    %213 = vmatprep.subr.bf16.mxu0 0
    %214 = vmatpush1.bf16.msra.mxu0 %v206
    %215 = vmatprep.subr.bf16.mxu0 0
    %216 = vmatpush1.bf16.msra.mxu0 %v207
    %217 = vmatprep.subr.bf16.mxu0 0
    %218 = vmatpush1.bf16.msra.mxu0 0
    %219 = vmatprep.subr.bf16.mxu0 0
    %220 = vmatpush1.bf16.msra.mxu0 0
    %221 = vmatprep.subr.bf16.mxu0 0
    %222 = vmatpush1.bf16.msra.mxu0 0
    %223 = vmatprep.subr.bf16.mxu0 0
    %224 = vmatpush1.bf16.msra.mxu0 0
    %225 = vmatprep.subr.bf16.mxu0 0
    %226 = vmatpush1.bf16.msra.mxu0 0
    %227 = vmatprep.subr.bf16.mxu0 0
    %228 = vmatpush1.bf16.msra.mxu0 0
    %229 = vmatprep.subr.bf16.mxu0 0
    %230 = vmatpush1.bf16.msra.mxu0 0
    %231 = vmatprep.subr.bf16.mxu0 0
    %232 = vmatpush1.bf16.msra.mxu0 0
    %233 = vmatprep.subr.bf16.mxu0 0
    %234 = vmatpush1.bf16.msra.mxu0 0
    %235 = vmatprep.subr.bf16.mxu0 0
    %236 = vmatpush1.bf16.msra.mxu0 0
    %237 = vmatprep.subr.bf16.mxu0 0
    %238 = vmatpush1.bf16.msra.mxu0 0
    %239 = vmatprep.subr.bf16.mxu0 0
    %240 = vmatpush1.bf16.msra.mxu0 0
    %241 = vmatprep.subr.bf16.mxu0 0
    %242 = vmatpush1.bf16.msra.mxu0 0
    %243 = vmatprep.subr.bf16.mxu0 0
    %244 = vmatpush1.bf16.msra.mxu0 0
    %245 = vmatprep.mubr.bf16.mxu0 0
    %246 = vmatmul.mubr.bf16.gmra.mrb[0].mxu0 %v211
    %v247 = vpop.f32.mrb[0].mxu0
    %v248 = vadd.f32 %v196, %v247
    %v249 = vpop.f32.mrb[0].mxu0
    %v250 = vpop.f32.mrb[0].mxu0
    %v251 = vpop.f32.mrb[0].mxu0
    %252 = vdwg.mxu0
    %v253 = vtanh.pop %v248
    %v256 = vunpack.c.l.s4 1966171168
    %v257 = vunpack.c.0.s8 %v256
    %v258 = vlaneseq
    %v259 = vshrl.u32 %v258, 7
    %v260 = vsub.s32 %v257, %v259
    %v261 = vrot.slane %v253, %v260
    %v262 = vcombine.high %v261, %v261
    %v264 = vunpack.c.l.s4 1966171168
    %v265 = vunpack.c.0.s8 %v264
    %v266 = vlaneseq
    %v267 = vshrl.u32 %v266, 7
    %v268 = vsub.s32 %v265, %v267
    %v269 = vrot.slane %v261, %v268
    %v271 = vunpack.c.l.s4 1966171168
    %v272 = vunpack.c.0.s8 %v271
    %v273 = vlaneseq
    %v274 = vshrl.u32 %v273, 7
    %v275 = vsub.s32 %v272, %v274
    %v276 = vrot.slane %v262, %v275
    %v277 = vlaneseq
    %v278 = vshrl.u32 %v277, 7
    %v279 = vsub.s32 0, %v278
    %v280 = vrot.slane %v269, %v279
    %v281 = vlaneseq
    %v282 = vshrl.u32 %v281, 7
    %v283 = vsub.s32 0, %v282
    %v284 = vrot.slane %v276, %v283
    %v287 = vmul.f32 %v185, %v280
    %v288 = vmul.f32 %v186, %v284
    %289 = vst.msk [vmem:[#allocation11] sm:$0xff] %vm140, %v287
    %290 = vst.msk [vmem:[#allocation11 + $0x8] sm:$0xff] %vm140, %v288
    %v291 = vld [vmem:[#allocation8] sm:$0xf]
    %v292 = vld [vmem:[#allocation8 + $0x4] sm:$0xf]
    %v293 = vld [vmem:[#allocation8 + $0x8] sm:$0xf]
    %v294 = vld [vmem:[#allocation8 + $0xc] sm:$0xf]
    %v295 = vld [vmem:[#allocation10] sm:$0x1]
    %v297 = vlaneseq
    %v298 = vshrl.u32 %v297, 7
    %v299 = vsub.s32 0, %v298
    %v300 = vrot.slane %v295, %v299
    %v306 = vunpack.c.l.b16 %v291
    %v307 = vunpack.c.l.b16 %v292
    %v308 = vunpack.c.l.b16 %v293
    %v309 = vunpack.c.l.b16 %v294
    %v310 = vpack.c.b16 %v307, %v306
    %v311 = vpack.c.b16 %v309, %v308
    %314 = vmatprep.subr.bf16.mxu0 0
    %315 = vmatpush1.bf16.msra.mxu0 %v310
    %316 = vmatprep.subr.bf16.mxu0 0
    %317 = vmatpush1.bf16.msra.mxu0 %v311
    %318 = vmatprep.subr.bf16.mxu0 0
    %319 = vmatpush1.bf16.msra.mxu0 0
    %320 = vmatprep.subr.bf16.mxu0 0
    %321 = vmatpush1.bf16.msra.mxu0 0
    %322 = vmatprep.subr.bf16.mxu0 0
    %323 = vmatpush1.bf16.msra.mxu0 0
    %324 = vmatprep.subr.bf16.mxu0 0
    %325 = vmatpush1.bf16.msra.mxu0 0
    %326 = vmatprep.subr.bf16.mxu0 0
    %327 = vmatpush1.bf16.msra.mxu0 0
    %328 = vmatprep.subr.bf16.mxu0 0
    %329 = vmatpush1.bf16.msra.mxu0 0
    %330 = vmatprep.subr.bf16.mxu0 0
    %331 = vmatpush1.bf16.msra.mxu0 0
    %332 = vmatprep.subr.bf16.mxu0 0
    %333 = vmatpush1.bf16.msra.mxu0 0
    %334 = vmatprep.subr.bf16.mxu0 0
    %335 = vmatpush1.bf16.msra.mxu0 0
    %336 = vmatprep.subr.bf16.mxu0 0
    %337 = vmatpush1.bf16.msra.mxu0 0
    %338 = vmatprep.subr.bf16.mxu0 0
    %339 = vmatpush1.bf16.msra.mxu0 0
    %340 = vmatprep.subr.bf16.mxu0 0
    %341 = vmatpush1.bf16.msra.mxu0 0
    %342 = vmatprep.subr.bf16.mxu0 0
    %343 = vmatpush1.bf16.msra.mxu0 0
    %344 = vmatprep.subr.bf16.mxu0 0
    %345 = vmatpush1.bf16.msra.mxu0 0
    %346 = vmatprep.mubr.bf16.mxu0 0
    %347 = vmatmul.mubr.bf16.gmra.mrb[0].mxu0 %v211
    %v348 = vpop.f32.mrb[0].mxu0
    %v349 = vadd.f32 %v300, %v348
    %v350 = vpop.f32.mrb[0].mxu0
    %v351 = vpop.f32.mrb[0].mxu0
    %v352 = vpop.f32.mrb[0].mxu0
    %353 = vdwg.mxu0
    %v354 = vtanh.pop %v349
    %vm355 = vcmask 254976
    %356 = vst.msk [vmem:[#allocation12] sm:$0x3] %vm355, %v354
    %v357 = vld [vmem:[%s8] sm:$0xf]
    %v358 = vld [vmem:[%s8 + $0x4] sm:$0xf]
    %v359 = vld [vmem:[%s8 + $0x8] sm:$0xf]
    %v360 = vld [vmem:[%s8 + $0xc] sm:$0xf]
    %v365 = vunpack.c.l.b16 %v357
    %v366 = vunpack.c.l.b16 %v358
    %v367 = vunpack.c.l.b16 %v359
    %v368 = vunpack.c.l.b16 %v360
    %v369 = vpack.c.b16 %v366, %v365
    %v370 = vpack.c.b16 %v368, %v367
    %373 = vmatprep.subr.bf16.mxu0 0
    %374 = vmatpush1.bf16.msra.mxu0 %v369
    %375 = vmatprep.subr.bf16.mxu0 0
    %376 = vmatpush1.bf16.msra.mxu0 %v370
    %377 = vmatprep.subr.bf16.mxu0 0
    %378 = vmatpush1.bf16.msra.mxu0 0
    %379 = vmatprep.subr.bf16.mxu0 0
    %380 = vmatpush1.bf16.msra.mxu0 0
    %381 = vmatprep.subr.bf16.mxu0 0
    %382 = vmatpush1.bf16.msra.mxu0 0
    %383 = vmatprep.subr.bf16.mxu0 0
    %384 = vmatpush1.bf16.msra.mxu0 0
    %385 = vmatprep.subr.bf16.mxu0 0
    %386 = vmatpush1.bf16.msra.mxu0 0
    %387 = vmatprep.subr.bf16.mxu0 0
    %388 = vmatpush1.bf16.msra.mxu0 0
    %389 = vmatprep.subr.bf16.mxu0 0
    %390 = vmatpush1.bf16.msra.mxu0 0
    %391 = vmatprep.subr.bf16.mxu0 0
    %392 = vmatpush1.bf16.msra.mxu0 0
    %393 = vmatprep.subr.bf16.mxu0 0
    %394 = vmatpush1.bf16.msra.mxu0 0
    %395 = vmatprep.subr.bf16.mxu0 0
    %396 = vmatpush1.bf16.msra.mxu0 0
    %397 = vmatprep.subr.bf16.mxu0 0
    %398 = vmatpush1.bf16.msra.mxu0 0
    %399 = vmatprep.subr.bf16.mxu0 0
    %400 = vmatpush1.bf16.msra.mxu0 0
    %401 = vmatprep.subr.bf16.mxu0 0
    %402 = vmatpush1.bf16.msra.mxu0 0
    %403 = vmatprep.subr.bf16.mxu0 0
    %404 = vmatpush1.bf16.msra.mxu0 0
    %405 = vmatprep.mubr.bf16.mxu0 0
    %406 = vmatmul.mubr.bf16.gmra.mrb[0].mxu0 %v142
    %v407 = vpop.f32.mrb[0].mxu0
    %v408 = vadd.f32 0.0, %v407
    %v409 = vpop.f32.mrb[0].mxu0
    %v410 = vpop.f32.mrb[0].mxu0
    %v411 = vadd.f32 0.0, %v410
    %v412 = vpop.f32.mrb[0].mxu0
    %413 = vdwg.mxu0
    %414 = vst.msk [vmem:[#allocation14] sm:$0xff] %vm140, %v408
    %415 = vst.msk [vmem:[#allocation14 + $0x8] sm:$0xff] %vm140, %v411
    %v416 = vld [vmem:[%s9] sm:$0xf]
    %v417 = vld [vmem:[%s9 + $0x4] sm:$0xf]
    %v418 = vld [vmem:[%s9 + $0x8] sm:$0xf]
    %v419 = vld [vmem:[%s9 + $0xc] sm:$0xf]
    %v420 = vld [vmem:[%s10] sm:$0x1]
    %v422 = vlaneseq
    %v423 = vshrl.u32 %v422, 7
    %v424 = vsub.s32 0, %v423
    %v425 = vrot.slane %v420, %v424
    %v431 = vunpack.c.l.b16 %v416
    %v432 = vunpack.c.l.b16 %v417
    %v433 = vunpack.c.l.b16 %v418
    %v434 = vunpack.c.l.b16 %v419
    %v435 = vpack.c.b16 %v432, %v431
    %v436 = vpack.c.b16 %v434, %v433
    %439 = vmatprep.subr.bf16.mxu0 0
    %440 = vmatpush1.bf16.msra.mxu0 %v435
    %441 = vmatprep.subr.bf16.mxu0 0
    %442 = vmatpush1.bf16.msra.mxu0 %v436
    %443 = vmatprep.subr.bf16.mxu0 0
    %444 = vmatpush1.bf16.msra.mxu0 0
    %445 = vmatprep.subr.bf16.mxu0 0
    %446 = vmatpush1.bf16.msra.mxu0 0
    %447 = vmatprep.subr.bf16.mxu0 0
    %448 = vmatpush1.bf16.msra.mxu0 0
    %449 = vmatprep.subr.bf16.mxu0 0
    %450 = vmatpush1.bf16.msra.mxu0 0
    %451 = vmatprep.subr.bf16.mxu0 0
    %452 = vmatpush1.bf16.msra.mxu0 0
    %453 = vmatprep.subr.bf16.mxu0 0
    %454 = vmatpush1.bf16.msra.mxu0 0
    %455 = vmatprep.subr.bf16.mxu0 0
    %456 = vmatpush1.bf16.msra.mxu0 0
    %457 = vmatprep.subr.bf16.mxu0 0
    %458 = vmatpush1.bf16.msra.mxu0 0
    %459 = vmatprep.subr.bf16.mxu0 0
    %460 = vmatpush1.bf16.msra.mxu0 0
    %461 = vmatprep.subr.bf16.mxu0 0
    %462 = vmatpush1.bf16.msra.mxu0 0
    %463 = vmatprep.subr.bf16.mxu0 0
    %464 = vmatpush1.bf16.msra.mxu0 0
    %465 = vmatprep.subr.bf16.mxu0 0
    %466 = vmatpush1.bf16.msra.mxu0 0
    %467 = vmatprep.subr.bf16.mxu0 0
    %468 = vmatpush1.bf16.msra.mxu0 0
    %469 = vmatprep.subr.bf16.mxu0 0
    %470 = vmatpush1.bf16.msra.mxu0 0
    %471 = vmatprep.mubr.bf16.mxu0 0
    %472 = vmatmul.mubr.bf16.gmra.mrb[0].mxu0 %v211
    %v473 = vpop.f32.mrb[0].mxu0
    %v474 = vadd.f32 %v425, %v473
    %v475 = vpop.f32.mrb[0].mxu0
    %v476 = vpop.f32.mrb[0].mxu0
    %v477 = vpop.f32.mrb[0].mxu0
    %478 = vdwg.mxu0
    %vm479 = vcmask 123904
    %480 = vst.msk [vmem:[#allocation15] sm:$0x3] %vm479, %v474
    // Predicated region
    $region66: #{tpu_custom_call.1} parent=1 // pred_check
      _
    $region67: #{tpu_custom_call.1} parent=1 // pred_check_branch
      %482 = sbr.rel (0) target = $region69
    $region68: #{tpu_custom_call.1} parent=1 // pred_region
      %s484 = ssub.s32 256, 256
      %485 = vsyncadd [#allocation4], %s484
      %s486 = sshll.u32 [#allocation11], 4
      %s487 = int_to_ptr.vmem [resolvable:$true] %s486
      %492 = dma.vmem_to_hbm [thread:$0]  %s487, 256, %s11, [#allocation4], 128, 128, 8
    $region69: #{tpu_custom_call.1} parent=1 // pred_fallthru
      _
    // Predicated region
    $region70: #{tpu_custom_call.1} parent=1 // pred_check
      _
    $region71: #{tpu_custom_call.1} parent=1 // pred_check_branch
      %494 = sbr.rel (0) target = $region73
    $region72: #{tpu_custom_call.1} parent=1 // pred_region
      %s496 = ssub.s32 32, 32
      %497 = vsyncadd [#allocation13], %s496
      %s499 = sshll.u32 [#allocation12], 4
      %s500 = int_to_ptr.vmem [resolvable:$true] %s499
      %502 = dma.vmem_to_hbm [thread:$0]  %s500, 32, %s12, [#allocation13]
    $region73: #{tpu_custom_call.1} parent=1 // pred_fallthru
      _
    // Predicated region
    $region74: #{tpu_custom_call.1} parent=1 // pred_check
      _
    $region75: #{tpu_custom_call.1} parent=1 // pred_check_branch
      %504 = sbr.rel (0) target = $region77
    $region76: #{tpu_custom_call.1} parent=1 // pred_region
      %s506 = ssub.s32 256, 256
      %507 = vsyncadd [#allocation13], %s506
      %s508 = sshll.u32 [#allocation14], 4
      %s509 = int_to_ptr.vmem [resolvable:$true] %s508
      %514 = dma.vmem_to_hbm [thread:$0]  %s509, 256, %s13, [#allocation13], 128, 128, 8
    $region77: #{tpu_custom_call.1} parent=1 // pred_fallthru
      _
    // Predicated region
    $region78: #{tpu_custom_call.1} parent=1 // pred_check
      _
    $region79: #{tpu_custom_call.1} parent=1 // pred_check_branch
      %516 = sbr.rel (0) target = $region81
    $region80: #{tpu_custom_call.1} parent=1 // pred_region
      %s518 = ssub.s32 32, 32
      %519 = vsyncadd [#allocation16], %s518
      %s521 = sshll.u32 [#allocation15], 4
      %s522 = int_to_ptr.vmem [resolvable:$true] %s521
      %524 = dma.vmem_to_hbm [thread:$0]  %s522, 32, %s14, [#allocation16]
    $region81: #{tpu_custom_call.1} parent=1 // pred_fallthru
      _
    // Predicated region
    $region82: #{tpu_custom_call.1} parent=1 // pred_check
      _
    $region83: #{tpu_custom_call.1} parent=1 // pred_check_branch
      %526 = sbr.rel (0) target = $region85
    $region84: #{tpu_custom_call.1} parent=1 // pred_region
      %527 = dma.done [#allocation4], 256
    $region85: #{tpu_custom_call.1} parent=1 // pred_fallthru
      _
    // Predicated region
    $region86: #{tpu_custom_call.1} parent=1 // pred_check
      _
    $region87: #{tpu_custom_call.1} parent=1 // pred_check_branch
      %529 = sbr.rel (0) target = $region89
    $region88: #{tpu_custom_call.1} parent=1 // pred_region
      %530 = dma.done [#allocation13], 32
    $region89: #{tpu_custom_call.1} parent=1 // pred_fallthru
      _
    // Predicated region
    $region90: #{tpu_custom_call.1} parent=1 // pred_check
      _
    $region91: #{tpu_custom_call.1} parent=1 // pred_check_branch
      %532 = sbr.rel (0) target = $region93
    $region92: #{tpu_custom_call.1} parent=1 // pred_region
      %533 = dma.done [#allocation13], 256
    $region93: #{tpu_custom_call.1} parent=1 // pred_fallthru
      _
    // Predicated region
    $region94: #{tpu_custom_call.1} parent=1 // pred_check
      _
    $region95: #{tpu_custom_call.1} parent=1 // pred_check_branch
      %535 = sbr.rel (0) target = $region97
    $region96: #{tpu_custom_call.1} parent=1 // pred_region
      %536 = dma.done [#allocation16], 32
    $region97: #{tpu_custom_call.1} parent=1 // pred_fallthru
      _
    %537 = vsyncpa [#allocation3], 1
    %538 = vsyncpa [#allocation6], 1
    %539 = vsyncpa [#allocation9], 1
    %540 = vsyncpa [#allocation4], 1
    %541 = vsyncpa [#allocation13], 1
    %542 = vsyncpa [#allocation16], 1

</llo_original>
